<compile_context>
chip_gen: v7x
topology: tpu7x:2x2x1
jax: 0.10.0
libtpu: 0.0.40
codegen_flags: <defaults>
</compile_context>

<pallas_src>
import functools
import math

import jax
import jax.numpy as jnp
from jax.experimental import pallas as pl
from jax.experimental.pallas import tpu as pltpu


_TARGET_BLOCK_BYTES = 4 * 1024 * 1024     # ~4 MiB of I/O per grid step (HBM roofline)


# ----------------------------- small helpers --------------------------------

def _cdiv(a, b):
    return -(-a // b)


def _round_up(a, b):
    return _cdiv(a, b) * b


def _vmem_params():
    """Generation-aware VMEM budgets (v5e/v6e: 128 MiB, v7x: 64 MiB)."""
    cap = 64 * 1024 * 1024
    try:
        cap = int(getattr(pltpu.get_tpu_info(), "vmem_capacity_bytes", cap))
    except Exception:
        pass
    cap = max(cap, 32 * 1024 * 1024)
    budget = min((cap * 3) // 4, cap - 16 * 1024 * 1024)   # working-set target
    limit_cap = cap - 8 * 1024 * 1024                      # headroom for Mosaic scratch
    kron_limit = (24 * 1024 * 1024 if cap >= 96 * 1024 * 1024
                  else 8 * 1024 * 1024)                    # fused-weight size cutoff
    return budget, limit_cap, kron_limit


def _interp_matrix(in_size, out_size, align_corners, scale_factor=None):
    """(out_size, in_size) interpolation matrix matching PyTorch bilinear rules.

    With align_corners=False and an explicit scale_factor, PyTorch's
    area_pixel_compute_scale uses 1/scale_factor (not in_size/out_size).
    """
    dst = jnp.arange(out_size, dtype=jnp.float32)
    if align_corners:
        if out_size > 1:
            src = dst * (in_size - 1) / (out_size - 1)
        else:
            src = jnp.zeros((out_size,), jnp.float32)
    else:
        if scale_factor is not None and scale_factor > 0:
            scale = 1.0 / float(scale_factor)
        else:
            scale = in_size / out_size
        src = (dst + 0.5) * scale - 0.5
        src = jnp.maximum(src, 0.0)          # PyTorch clamps negative source coords
    lo = jnp.clip(jnp.floor(src).astype(jnp.int32), 0, in_size - 1)
    hi = jnp.minimum(lo + 1, in_size - 1)
    frac = src - lo.astype(jnp.float32)
    rows = jnp.arange(out_size)
    w = jnp.zeros((out_size, in_size), jnp.float32)
    w = w.at[rows, lo].add(1.0 - frac)
    w = w.at[rows, hi].add(frac)
    return w


def _choose_rows(r, b_max, pack, row_bytes):
    """Rows per grid step: multiple of `pack`, ~4 MiB blocks, minimal padding."""
    r_p = _round_up(max(int(r), 1), pack)
    b_cap = max(pack, (min(int(b_max), r_p) // pack) * pack)
    b_tgt = _round_up(max(_TARGET_BLOCK_BYTES // max(int(row_bytes), 1), 1), pack)
    b_tgt = max(pack, min(b_tgt, b_cap))
    steps0 = max(1, _cdiv(r_p, b_tgt))
    best_b, best_pad = None, None
    for s in range(steps0, steps0 + 8):          # search near target step count
        b = min(_round_up(_cdiv(r_p, s), pack), b_cap)
        pad = b * _cdiv(r_p, b) - r_p
        if best_pad is None or pad < best_pad:
            best_b, best_pad = b, pad
        if pad == 0:
            break
    return best_b, best_b * _cdiv(r_p, best_b)


# ------------------------------ Pallas kernel -------------------------------

def _matmul_kernel(x_ref, w_ref, o_ref):
    # One lane-dense MXU matmul per grid step: (B, K) @ (K, Mt) -> (B, Mt).
    dt = jnp.promote_types(x_ref.dtype, w_ref.dtype)
    o_ref[...] = jnp.dot(
        x_ref[...].astype(dt), w_ref[...].astype(dt),
        preferred_element_type=jnp.float32,
    ).astype(o_ref.dtype)


def _rows_times_weight(x2d, w2d, out_dtype, *, vmem_budget, vmem_limit_cap):
    """Tiled (R, K) @ (K, M) -> (R, M) with the weight resident in VMEM."""
    R, K = x2d.shape
    Kw, M = w2d.shape
    assert K == Kw
    in_b = x2d.dtype.itemsize
    w_b = w2d.dtype.itemsize
    out_b = jnp.dtype(out_dtype).itemsize
    # Sublane pack of the narrower I/O dtype: 8 for f32, 16 for bf16, 32 for i8.
    pack = max(8, 32 // in_b, 32 // out_b)

    weight_bytes = K * M * w_b                       # single buffer (resident weight)
    # Double-buffered input/output blocks + one f32 accumulator per row.
    row_bytes = 2 * (K * in_b + M * out_b) + M * 4
    # Callers guarantee weight_bytes << vmem_budget; clamp keeps this non-degenerate.
    b_budget = max(pack, (vmem_budget - weight_bytes) // max(row_bytes, 1))
    B, r_pad = _choose_rows(R, b_budget, pack, row_bytes)
    n_rows = r_pad // B

    # With a single row block (tiny nc), split the output columns so both v7x
    # TensorCores get work and the pipeline has >=2 steps; tiles stay >=128 lanes.
    m_splits = 2 if (n_rows == 1 and M % 256 == 0) else 1
    Mt = M // m_splits

    if r_pad != R:
        x2d = jnp.pad(x2d, ((0, r_pad - R), (0, 0)))

    if m_splits == 1:
        # Constant index map -> weight never re-DMA'd; single-buffer it to save VMEM.
        w_spec = pl.BlockSpec((K, M), lambda i, j: (0, 0),
                              pipeline_mode=pl.Buffered(1))
        w_bufs = 1
    else:
        w_spec = pl.BlockSpec((K, Mt), lambda i, j: (0, j))
        w_bufs = 2

    vmem_needed = (w_bufs * K * Mt * w_b
                   + 2 * B * (K * in_b + Mt * out_b) + B * Mt * 4)
    vmem_limit = int(min(vmem_limit_cap,
                         max(32 * 1024 * 1024, vmem_needed + vmem_needed // 4)))

    out = pl.pallas_call(
        _matmul_kernel,
        out_shape=jax.ShapeDtypeStruct((r_pad, M), out_dtype),
        grid_spec=pltpu.PrefetchScalarGridSpec(
            num_scalar_prefetch=0,
            grid=(n_rows, m_splits),
            in_specs=[pl.BlockSpec((B, K), lambda i, j: (i, 0)), w_spec],
            out_specs=pl.BlockSpec((B, Mt), lambda i, j: (i, j)),
        ),
        compiler_params=pltpu.CompilerParams(
            dimension_semantics=("parallel", "parallel"),
            vmem_limit_bytes=vmem_limit),
        cost_estimate=pl.CostEstimate(
            flops=2 * r_pad * K * M,
            transcendentals=0,
            bytes_accessed=r_pad * (K * in_b + M * out_b) + weight_bytes),
    )(x2d, w2d)
    return out[:R]


# ------------------------------ public wrapper ------------------------------

@functools.partial(jax.jit, static_argnames=("scale_factor", "align_corners"))
def upsample_bilinear2d(x, scale_factor=2.0, align_corners=None):
    """x: (N, C, H, W). Matches F.interpolate(x, scale_factor, mode='bilinear')."""
    if isinstance(scale_factor, (tuple, list)):
        sh, sw = float(scale_factor[0]), float(scale_factor[1])
    else:
        sh = sw = float(scale_factor)
    ac = bool(align_corners) if align_corners is not None else False

    n, c, h_in, w_in = x.shape
    # PyTorch: output size = floor(input_size * scale_factor).
    h_out = int(math.floor(h_in * sh))
    w_out = int(math.floor(w_in * sw))

    wh = _interp_matrix(h_in, h_out, ac, sh)     # (H_out, H_in)
    ww = _interp_matrix(w_in, w_out, ac, sw)     # (W_out, W_in)

    vmem_budget, vmem_limit_cap, kron_limit = _vmem_params()

    nc = n * c
    K = h_in * w_in
    M = h_out * w_out
    # Bilinear weights for dyadic scales (2, 0.5, ...) are exact in bf16; keep f32
    # weights whenever the activations are f32 so precision is preserved.
    w_dtype = jnp.bfloat16 if x.dtype == jnp.bfloat16 else jnp.float32
    kron_bytes = K * M * jnp.dtype(w_dtype).itemsize

    # Path choice: weight must fit resident in VMEM AND the dense Kronecker matmul
    # (which is ~96-98% zeros) must not cost more than ~16x the separable FLOPs,
    # otherwise the fused path flips from HBM-bound to MXU-bound.
    sep_flops = h_out * h_in * w_in + h_out * w_in * w_out
    use_fused = (kron_bytes <= kron_limit) and (K * M <= 16 * sep_flops)

    if use_fused:
        # Wk[ih*W_in+iw, oh*W_out+ow] = Wh[oh,ih] * Ww[ow,iw]: pre-transposed, so the
        # kernel is a single lane-dense (B, K) @ (K, M) matmul per grid step.
        wk = jnp.kron(wh.T, ww.T).astype(w_dtype)                 # (K, M)
        out = _rows_times_weight(x.reshape(nc, K), wk, x.dtype,
                                 vmem_budget=vmem_budget,
                                 vmem_limit_cap=vmem_limit_cap)
        return out.reshape(n, c, h_out, w_out)

    # Separable fallback for large spatial sizes: two lane-dense 2-D matmuls
    # (no broadcast weights, unmasked flattened stores); the transposes between
    # them are XLA-side layout plumbing.
    # TODO(synk): fuse both contractions into one kernel (in-kernel transpose) to
    # avoid the intermediate HBM round-trips on very large spatial shapes.
    t = _rows_times_weight(x.reshape(nc * h_in, w_in),
                           ww.T.astype(jnp.float32), jnp.float32,
                           vmem_budget=vmem_budget,
                           vmem_limit_cap=vmem_limit_cap)          # (nc*h_in, w_out)
    t = t.reshape(nc, h_in, w_out).transpose(0, 2, 1).reshape(nc * w_out, h_in)
    y = _rows_times_weight(t, wh.T.astype(jnp.float32), x.dtype,
                           vmem_budget=vmem_budget,
                           vmem_limit_cap=vmem_limit_cap)          # (nc*w_out, h_out)
    out = y.reshape(nc, w_out, h_out).transpose(0, 2, 1)
    return out.reshape(n, c, h_out, w_out)


# ----------------------------------- test -----------------------------------

if __name__ == "__main__":
    key = jax.random.PRNGKey(0)
    x = jax.random.normal(key, (2, 4, 16, 16), dtype=jnp.float32)

    # Default module config: scale_factor=2.0, align_corners=None (-> False).
    out = jax.block_until_ready(
        upsample_bilinear2d(x, scale_factor=2.0, align_corners=None))
    assert out.shape == (2, 4, 32, 32), out.shape
    wh = _interp_matrix(16, 32, False, 2.0)
    ww = _interp_matrix(16, 32, False, 2.0)
    ref = jnp.einsum("oh,nchw,pw->ncop", wh, x, ww,
                     precision=jax.lax.Precision.HIGHEST)
    assert jnp.allclose(out, ref, atol=1e-5, rtol=1e-5)

    # Non-integer scale + align_corners=True (fused path, different weights).
    out2 = jax.block_until_ready(
        upsample_bilinear2d(x, scale_factor=1.5, align_corners=True))
    assert out2.shape == (2, 4, 24, 24), out2.shape
    wh2 = _interp_matrix(16, 24, True, 1.5)
    ww2 = _interp_matrix(16, 24, True, 1.5)
    ref2 = jnp.einsum("oh,nchw,pw->ncop", wh2, x, ww2,
                      precision=jax.lax.Precision.HIGHEST)
    assert jnp.allclose(out2, ref2, atol=1e-5, rtol=1e-5)

    # Large spatial size -> separable fallback path (two 2-D matmul kernels).
    x3 = jax.random.normal(jax.random.PRNGKey(1), (1, 2, 64, 64), dtype=jnp.float32)
    out3 = jax.block_until_ready(
        upsample_bilinear2d(x3, scale_factor=2.0, align_corners=None))
    assert out3.shape == (1, 2, 128, 128), out3.shape
    wh3 = _interp_matrix(64, 128, False, 2.0)
    ww3 = _interp_matrix(64, 128, False, 2.0)
    ref3 = jnp.einsum("oh,nchw,pw->ncop", wh3, x3, ww3,
                      precision=jax.lax.Precision.HIGHEST)
    assert jnp.allclose(out3, ref3, atol=1e-4, rtol=1e-4)

    print("KERNEL_OK")
</pallas_src>

<mosaic_0001>
module attributes {stable_mosaic.version = 11 : i64} {
  func.func private @main(%arg0: i32) attributes {dimension_semantics = [#tpu.dimension_semantics<core_parallel>], iteration_bounds = array<i64: 2>, tpu.core_type = #tpu.core_type<sc_scalar_subcore>, window_params = []} {
    return
  }
}

module attributes {stable_mosaic.version = 11 : i64} {
  func.func private @main(%arg0: i32) attributes {dimension_semantics = [#tpu.dimension_semantics<core_parallel>], iteration_bounds = array<i64: 2>, tpu.core_type = #tpu.core_type<sc_scalar_subcore>, window_params = []} {
    return
  }
}

module attributes {stable_mosaic.version = 11 : i64} {
  func.func @_matmul_kernel(%arg0: i32, %arg1: i32, %arg2: memref<8x256xf32, #tpu.memory_space<vmem>>, %arg3: memref<256x512xf32, #tpu.memory_space<vmem>>, %arg4: memref<8x512xf32, #tpu.memory_space<vmem>>) attributes {dimension_semantics = [#tpu.dimension_semantics<parallel>, #tpu.dimension_semantics<parallel>], iteration_bounds = array<i64: 1, 2>, scalar_prefetch = 0 : i64, scratch_operands = 0 : i64, tpu.core_type = #tpu.core_type<tc>, window_params = [{transform_indices = @transform_0, window_bounds = array<i64: 8, 256>}, {transform_indices = @transform_1, window_bounds = array<i64: 256, 512>}, {transform_indices = @transform_2, window_bounds = array<i64: 8, 512>}]} {
    %c0 = arith.constant 0 : index
    %c0_0 = arith.constant 0 : index
    %0 = vector.load %arg2[%c0, %c0_0] : memref<8x256xf32, #tpu.memory_space<vmem>>, vector<8x256xf32>
    %c0_1 = arith.constant 0 : index
    %c0_2 = arith.constant 0 : index
    %1 = vector.load %arg3[%c0_1, %c0_2] : memref<256x512xf32, #tpu.memory_space<vmem>>, vector<256x512xf32>
    %cst = arith.constant dense<0.000000e+00> : vector<8x512xf32>
    %2 = tpu.matmul %0, %1, %cst {dimension_numbers = #tpu.dot_dimension_numbers<[1], [0], [0], [1], [0, 0, 1, 1], [], []>} : vector<8x256xf32>, vector<256x512xf32>, vector<8x512xf32> -> vector<8x512xf32>
    %c0_3 = arith.constant 0 : index
    %c0_4 = arith.constant 0 : index
    %3 = vector.load %arg4[%c0_3, %c0_4] : memref<8x512xf32, #tpu.memory_space<vmem>>, vector<8x512xf32>
    tpu.vector_store %arg4[%c0_3, %c0_4], %2 {strides = array<i32>} : memref<8x512xf32, #tpu.memory_space<vmem>>, vector<8x512xf32>,
    return
  }
  func.func @transform_0(%arg0: i32, %arg1: i32) -> (i32, i32) {
    %c0_i32 = arith.constant 0 : i32
    %c0_i32_0 = arith.constant 0 : i32
    return %arg0, %c0_i32 : i32, i32
  }
  func.func @transform_1(%arg0: i32, %arg1: i32) -> (i32, i32) {
    %c0_i32 = arith.constant 0 : i32
    %c0_i32_0 = arith.constant 0 : i32
    return %c0_i32, %arg1 : i32, i32
  }
  func.func @transform_2(%arg0: i32, %arg1: i32) -> (i32, i32) {
    %c0_i32 = arith.constant 0 : i32
    return %arg0, %arg1 : i32, i32
  }
}

</mosaic_0001>

<llo_original>
// kernel: upsample_bilinear2d.1
$region0: #{upsample_bilinear2d.1}
  #allocation0 [shape = 'u32[]', space=smem, size = 0x4, offset = 0x4, fixed_abs, tag = 'smem constant byte address 0x4 - core index']
  #allocation1 [shape = 'u32[144,128]{1,0:T(1,128)}', space=vmem, size = 0x12000, scoped, tag = 'internal scratch']
  %s0 = inlined_call_operand.vmem [shape: f32[8,256], index: 0, kind: input, shape index: {}]
  %s1 = inlined_call_operand.vmem [shape: f32[256,1024], index: 1, kind: input, shape index: {}]
  %s2 = inlined_call_operand.vmem [shape: f32[8,1024], index: 2, kind: output, shape index: {}]
  %s3 = sld [smem:[#allocation0]]
  $region64: #{upsample_bilinear2d.1} parent=0
    _
  %s5 = ssub.s32 1, %s3
  %s6 = scalar_select 0, %s5, %s3
  $region1: #{upsample_bilinear2d.1} parent=0
    #allocation2 [shape = 'u8[1048576]{0}', space=vmem, size = 0x100000, scoped, tag = 'input window, operand 1']
    loop: start=0, step=1, limit=4
    $region2: #{upsample_bilinear2d.1} parent=1 // loop_pre_header
      _
    $region3: #{upsample_bilinear2d.1} parent=1 // loop_header
      %s8 = sphi 0, %s12
      %p9 = scmp.ge.s32.totalorder %s8, 4
      %s15 = sphi 0, %s27
      %s16 = sphi 0, %s23
      %s17 = sphi 0, %s15
      %s18 = sphi 0, %s16
      %s19 = sphi 0, %s17
      %s20 = sphi 0, %s18
      %s30 = sphi 0, %s32
      %s33 = sphi 0, %s30
      %s34 = sphi 0, %s33
      %s50 = sphi 0, %s34
      %s56 = sphi 0, %s58
      %s59 = sphi 0, %s56
      %s60 = sphi 0, %s59
      %s76 = sphi 0, %s60
      %s84 = sphi 0, %s86
      %s87 = sphi 0, %s84
      %s88 = sphi 0, %s87
      %s104 = sphi 0, %s88
    $region4: #{upsample_bilinear2d.1} parent=1 // loop_header_branch
      %11 = sbr.rel (%p9) target = $region8
    $region5: #{upsample_bilinear2d.1} parent=1 // loop_body
      %s13 = ssub.s32 %s8, 1
      %s14 = ssub.s32 %s8, 2
      %s21 = sadd.s32 1, %s16
      %p22 = scmp.ge.s32.totalorder %s21, 2
      %s23 = scalar_select %p22, 0, %s21
      %s24 = sadd.s32 1, %s15
      %s25 = scalar_select %p22, %s24, %s15
      %p26 = scmp.ge.s32.totalorder %s25, 1
      %s27 = scalar_select %p26, 0, %s25
      %s28 = ssub.s32 %s15, %s27
      %p29 = scmp.eq.s32.totalorder %s28, 0
      %s31 = sadd.s32 %s30, 1
      %s32 = scalar_select %p29, %s30, %s31
      %p35 = pneg %p29
      %p36 = scmp.eq.s32.totalorder %s8, 1
      %p37 = por %p35, %p36
      %p38 = scmp.ne.s32.totalorder %s30, %s33
      %p39 = scmp.eq.s32.totalorder %s8, 0
      %p40 = por %p38, %p39
      %p41 = scmp.ne.s32.totalorder %s30, %s33
      %p42 = scmp.eq.s32.totalorder %s13, 1
      %p43 = por %p41, %p42
      %p44 = scmp.ne.s32.totalorder %s33, %s34
      %p45 = scmp.eq.s32.totalorder %s13, 0
      %p46 = por %p44, %p45
      %p47 = scmp.ne.s32.totalorder %s33, %s34
      %p48 = scmp.eq.s32.totalorder %s14, 1
      %p49 = por %p47, %p48
      %p51 = scmp.ne.s32.totalorder %s34, %s50
      %p52 = scmp.eq.s32.totalorder %s14, 0
      %p53 = por %p51, %p52
      %s54 = ssub.s32 %s16, %s23
      %p55 = scmp.eq.s32.totalorder %s54, 0
      %s57 = sadd.s32 %s56, 1
      %s58 = scalar_select %p55, %s56, %s57
      %p61 = pneg %p55
      %p62 = scmp.eq.s32.totalorder %s8, 1
      %p63 = por %p61, %p62
      %p64 = scmp.ne.s32.totalorder %s56, %s59
      %p65 = scmp.eq.s32.totalorder %s8, 0
      %p66 = por %p64, %p65
      %p67 = scmp.ne.s32.totalorder %s56, %s59
      %p68 = scmp.eq.s32.totalorder %s13, 1
      %p69 = por %p67, %p68
      %p70 = scmp.ne.s32.totalorder %s59, %s60
      %p71 = scmp.eq.s32.totalorder %s13, 0
      %p72 = por %p70, %p71
      %p73 = scmp.ne.s32.totalorder %s59, %s60
      %p74 = scmp.eq.s32.totalorder %s14, 1
      %p75 = por %p73, %p74
      %p77 = scmp.ne.s32.totalorder %s60, %s76
      %p78 = scmp.eq.s32.totalorder %s14, 0
      %p79 = por %p77, %p78
      %s80 = ssub.s32 %s15, %s27
      %s81 = ssub.s32 %s16, %s23
      %s82 = sor.u32 %s80, %s81
      %p83 = scmp.eq.s32.totalorder %s82, 0
      %s85 = sadd.s32 %s84, 1
      %s86 = scalar_select %p83, %s84, %s85
      %p89 = pneg %p83
      %p90 = scmp.eq.s32.totalorder %s8, 1
      %p91 = por %p89, %p90
      %p92 = scmp.ne.s32.totalorder %s84, %s87
      %p93 = scmp.eq.s32.totalorder %s8, 0
      %p94 = por %p92, %p93
      %p95 = scmp.ne.s32.totalorder %s84, %s87
      %p96 = scmp.eq.s32.totalorder %s13, 1
      %p97 = por %p95, %p96
      %p98 = scmp.ne.s32.totalorder %s87, %s88
      %p99 = scmp.eq.s32.totalorder %s13, 0
      %p100 = por %p98, %p99
      %p101 = scmp.ne.s32.totalorder %s87, %s88
      %p102 = scmp.eq.s32.totalorder %s14, 1
      %p103 = por %p101, %p102
      %p105 = scmp.ne.s32.totalorder %s88, %s104
      %p106 = scmp.eq.s32.totalorder %s14, 0
      %p107 = por %p105, %p106
      %p108 = scmp.le.s32.totalorder 1, %s8
      %p109 = scmp.lt.s32.totalorder %s8, 3
      %p110 = pnand %p108, %p109
      %p111 = pneg %p110
      // Predicated region
      $region9: #{upsample_bilinear2d.1} parent=5 // pred_check
        _
      $region10: #{upsample_bilinear2d.1} parent=5 // pred_check_branch
        %113 = sbr.rel (%p110) target = $region12
      $region11: #{upsample_bilinear2d.1} parent=5 // pred_region
        %s114 = ssub.s32 %s8, 1
        // Predicated region
        $region13: #{upsample_bilinear2d.1} parent=11 // pred_check
          %p115 = pneg %p46
        $region14: #{upsample_bilinear2d.1} parent=11 // pred_check_branch
          %117 = sbr.rel (%p115) target = $region16
        $region15: #{upsample_bilinear2d.1} parent=11 // pred_region
          %p118 = scmp.lt.s32.totalorder %s17, 0
          %s119 = scalar_select %p118, %s17, 0
          %s120 = smul.addr %s119, 2
          %s121 = smul.addr %s120, 8
          %s122 = scalar_lea.vmem %s0, %s121
        $region16: #{upsample_bilinear2d.1} parent=11 // pred_fallthru
          _
      $region12: #{upsample_bilinear2d.1} parent=5 // pred_fallthru
        _
      %p123 = scmp.lt.s32.totalorder %s8, 2
      // Predicated region
      $region17: #{upsample_bilinear2d.1} parent=5 // pred_check
        %p124 = pneg %p123
      $region18: #{upsample_bilinear2d.1} parent=5 // pred_check_branch
        %126 = sbr.rel (%p124) target = $region20
      $region19: #{upsample_bilinear2d.1} parent=5 // pred_region
        // Predicated region
        $region21: #{upsample_bilinear2d.1} parent=19 // pred_check
          %p127 = pneg %p66
        $region22: #{upsample_bilinear2d.1} parent=19 // pred_check_branch
          %129 = sbr.rel (%p127) target = $region24
        $region23: #{upsample_bilinear2d.1} parent=19 // pred_region
          %s130 = sand.u32 %s56, 1
          %s131 = sand.u32 %s56, 1
          %s132 = smul.addr %s131, 1024
          %s133 = scalar_lea.vmem [#allocation2], %s132
          %s134 = smul.u32 4, %s16
          %s135 = smul.addr %s134, 8
          %s136 = scalar_lea.vmem %s1, %s135
          // Predicated region
          $region25: #{upsample_bilinear2d.1} parent=23 // pred_check
            _
          $region26: #{upsample_bilinear2d.1} parent=23 // pred_check_branch
            %138 = sbr.rel (0) target = $region28
          $region27: #{upsample_bilinear2d.1} parent=23 // pred_region
            // Predicated region
            $region29: #{upsample_bilinear2d.1} parent=27 // pred_check
              _
            $region30: #{upsample_bilinear2d.1} parent=27 // pred_check_branch
              %140 = sbr.rel (0) target = $region32
            $region31: #{upsample_bilinear2d.1} parent=27 // pred_region
              loop: start=0, step=1, limit=1
              $region33: #{upsample_bilinear2d.1} parent=31 // loop_pre_header
                _
              $region34: #{upsample_bilinear2d.1} parent=31 // loop_header
                %s142 = sphi 0, %s146
                %p143 = scmp.ge.s32.totalorder %s142, 1
                %s147 = sphi %s136, %s136
                %s148 = sphi %s133, %s133
              $region35: #{upsample_bilinear2d.1} parent=31 // loop_header_branch
                %145 = sbr.rel (%p143) target = $region39
              $region36: #{upsample_bilinear2d.1} parent=31 // loop_body
                %v149 = vld [vmem:[%s147] sm:$0xff]
                %150 = vst [vmem:[%s148] sm:$0xff] %v149
                %v151 = vld [vmem:[%s147 + $0x8] sm:$0xff]
                %152 = vst [vmem:[%s148 + $0x8] sm:$0xff] %v151
                %v153 = vld [vmem:[%s147 + $0x10] sm:$0xff]
                %154 = vst [vmem:[%s148 + $0x10] sm:$0xff] %v153
                %v155 = vld [vmem:[%s147 + $0x18] sm:$0xff]
                %156 = vst [vmem:[%s148 + $0x18] sm:$0xff] %v155
                %v157 = vld [vmem:[%s147 + $0x40] sm:$0xff]
                %158 = vst [vmem:[%s148 + $0x20] sm:$0xff] %v157
                %v159 = vld [vmem:[%s147 + $0x48] sm:$0xff]
                %160 = vst [vmem:[%s148 + $0x28] sm:$0xff] %v159
                %v161 = vld [vmem:[%s147 + $0x50] sm:$0xff]
                %162 = vst [vmem:[%s148 + $0x30] sm:$0xff] %v161
                %v163 = vld [vmem:[%s147 + $0x58] sm:$0xff]
                %164 = vst [vmem:[%s148 + $0x38] sm:$0xff] %v163
                %v165 = vld [vmem:[%s147 + $0x80] sm:$0xff]
                %166 = vst [vmem:[%s148 + $0x40] sm:$0xff] %v165
                %v167 = vld [vmem:[%s147 + $0x88] sm:$0xff]
                %168 = vst [vmem:[%s148 + $0x48] sm:$0xff] %v167
                %v169 = vld [vmem:[%s147 + $0x90] sm:$0xff]
                %170 = vst [vmem:[%s148 + $0x50] sm:$0xff] %v169
                %v171 = vld [vmem:[%s147 + $0x98] sm:$0xff]
                %172 = vst [vmem:[%s148 + $0x58] sm:$0xff] %v171
                %v173 = vld [vmem:[%s147 + $0xc0] sm:$0xff]
                %174 = vst [vmem:[%s148 + $0x60] sm:$0xff] %v173
                %v175 = vld [vmem:[%s147 + $0xc8] sm:$0xff]
                %176 = vst [vmem:[%s148 + $0x68] sm:$0xff] %v175
                %v177 = vld [vmem:[%s147 + $0xd0] sm:$0xff]
                %178 = vst [vmem:[%s148 + $0x70] sm:$0xff] %v177
                %v179 = vld [vmem:[%s147 + $0xd8] sm:$0xff]
                %180 = vst [vmem:[%s148 + $0x78] sm:$0xff] %v179
                %v181 = vld [vmem:[%s147 + $0x100] sm:$0xff]
                %182 = vst [vmem:[%s148 + $0x80] sm:$0xff] %v181
                %v183 = vld [vmem:[%s147 + $0x108] sm:$0xff]
                %184 = vst [vmem:[%s148 + $0x88] sm:$0xff] %v183
                %v185 = vld [vmem:[%s147 + $0x110] sm:$0xff]
                %186 = vst [vmem:[%s148 + $0x90] sm:$0xff] %v185
                %v187 = vld [vmem:[%s147 + $0x118] sm:$0xff]
                %188 = vst [vmem:[%s148 + $0x98] sm:$0xff] %v187
                %v189 = vld [vmem:[%s147 + $0x140] sm:$0xff]
                %190 = vst [vmem:[%s148 + $0xa0] sm:$0xff] %v189
                %v191 = vld [vmem:[%s147 + $0x148] sm:$0xff]
                %192 = vst [vmem:[%s148 + $0xa8] sm:$0xff] %v191
                %v193 = vld [vmem:[%s147 + $0x150] sm:$0xff]
                %194 = vst [vmem:[%s148 + $0xb0] sm:$0xff] %v193
                %v195 = vld [vmem:[%s147 + $0x158] sm:$0xff]
                %196 = vst [vmem:[%s148 + $0xb8] sm:$0xff] %v195
                %v197 = vld [vmem:[%s147 + $0x180] sm:$0xff]
                %198 = vst [vmem:[%s148 + $0xc0] sm:$0xff] %v197
                %v199 = vld [vmem:[%s147 + $0x188] sm:$0xff]
                %200 = vst [vmem:[%s148 + $0xc8] sm:$0xff] %v199
                %v201 = vld [vmem:[%s147 + $0x190] sm:$0xff]
                %202 = vst [vmem:[%s148 + $0xd0] sm:$0xff] %v201
                %v203 = vld [vmem:[%s147 + $0x198] sm:$0xff]
                %204 = vst [vmem:[%s148 + $0xd8] sm:$0xff] %v203
                %v205 = vld [vmem:[%s147 + $0x1c0] sm:$0xff]
                %206 = vst [vmem:[%s148 + $0xe0] sm:$0xff] %v205
                %v207 = vld [vmem:[%s147 + $0x1c8] sm:$0xff]
                %208 = vst [vmem:[%s148 + $0xe8] sm:$0xff] %v207
                %v209 = vld [vmem:[%s147 + $0x1d0] sm:$0xff]
                %210 = vst [vmem:[%s148 + $0xf0] sm:$0xff] %v209
                %v211 = vld [vmem:[%s147 + $0x1d8] sm:$0xff]
                %212 = vst [vmem:[%s148 + $0xf8] sm:$0xff] %v211
                %v213 = vld [vmem:[%s147 + $0x200] sm:$0xff]
                %214 = vst [vmem:[%s148 + $0x100] sm:$0xff] %v213
                %v215 = vld [vmem:[%s147 + $0x208] sm:$0xff]
                %216 = vst [vmem:[%s148 + $0x108] sm:$0xff] %v215
                %v217 = vld [vmem:[%s147 + $0x210] sm:$0xff]
                %218 = vst [vmem:[%s148 + $0x110] sm:$0xff] %v217
                %v219 = vld [vmem:[%s147 + $0x218] sm:$0xff]
                %220 = vst [vmem:[%s148 + $0x118] sm:$0xff] %v219
                %v221 = vld [vmem:[%s147 + $0x240] sm:$0xff]
                %222 = vst [vmem:[%s148 + $0x120] sm:$0xff] %v221
                %v223 = vld [vmem:[%s147 + $0x248] sm:$0xff]
                %224 = vst [vmem:[%s148 + $0x128] sm:$0xff] %v223
                %v225 = vld [vmem:[%s147 + $0x250] sm:$0xff]
                %226 = vst [vmem:[%s148 + $0x130] sm:$0xff] %v225
                %v227 = vld [vmem:[%s147 + $0x258] sm:$0xff]
                %228 = vst [vmem:[%s148 + $0x138] sm:$0xff] %v227
                %v229 = vld [vmem:[%s147 + $0x280] sm:$0xff]
                %230 = vst [vmem:[%s148 + $0x140] sm:$0xff] %v229
                %v231 = vld [vmem:[%s147 + $0x288] sm:$0xff]
                %232 = vst [vmem:[%s148 + $0x148] sm:$0xff] %v231
                %v233 = vld [vmem:[%s147 + $0x290] sm:$0xff]
                %234 = vst [vmem:[%s148 + $0x150] sm:$0xff] %v233
                %v235 = vld [vmem:[%s147 + $0x298] sm:$0xff]
                %236 = vst [vmem:[%s148 + $0x158] sm:$0xff] %v235
                %v237 = vld [vmem:[%s147 + $0x2c0] sm:$0xff]
                %238 = vst [vmem:[%s148 + $0x160] sm:$0xff] %v237
                %v239 = vld [vmem:[%s147 + $0x2c8] sm:$0xff]
                %240 = vst [vmem:[%s148 + $0x168] sm:$0xff] %v239
                %v241 = vld [vmem:[%s147 + $0x2d0] sm:$0xff]
                %242 = vst [vmem:[%s148 + $0x170] sm:$0xff] %v241
                %v243 = vld [vmem:[%s147 + $0x2d8] sm:$0xff]
                %244 = vst [vmem:[%s148 + $0x178] sm:$0xff] %v243
                %v245 = vld [vmem:[%s147 + $0x300] sm:$0xff]
                %246 = vst [vmem:[%s148 + $0x180] sm:$0xff] %v245
                %v247 = vld [vmem:[%s147 + $0x308] sm:$0xff]
                %248 = vst [vmem:[%s148 + $0x188] sm:$0xff] %v247
                %v249 = vld [vmem:[%s147 + $0x310] sm:$0xff]
                %250 = vst [vmem:[%s148 + $0x190] sm:$0xff] %v249
                %v251 = vld [vmem:[%s147 + $0x318] sm:$0xff]
                %252 = vst [vmem:[%s148 + $0x198] sm:$0xff] %v251
                %v253 = vld [vmem:[%s147 + $0x340] sm:$0xff]
                %254 = vst [vmem:[%s148 + $0x1a0] sm:$0xff] %v253
                %v255 = vld [vmem:[%s147 + $0x348] sm:$0xff]
                %256 = vst [vmem:[%s148 + $0x1a8] sm:$0xff] %v255
                %v257 = vld [vmem:[%s147 + $0x350] sm:$0xff]
                %258 = vst [vmem:[%s148 + $0x1b0] sm:$0xff] %v257
                %v259 = vld [vmem:[%s147 + $0x358] sm:$0xff]
                %260 = vst [vmem:[%s148 + $0x1b8] sm:$0xff] %v259
                %v261 = vld [vmem:[%s147 + $0x380] sm:$0xff]
                %262 = vst [vmem:[%s148 + $0x1c0] sm:$0xff] %v261
                %v263 = vld [vmem:[%s147 + $0x388] sm:$0xff]
                %264 = vst [vmem:[%s148 + $0x1c8] sm:$0xff] %v263
                %v265 = vld [vmem:[%s147 + $0x390] sm:$0xff]
                %266 = vst [vmem:[%s148 + $0x1d0] sm:$0xff] %v265
                %v267 = vld [vmem:[%s147 + $0x398] sm:$0xff]
                %268 = vst [vmem:[%s148 + $0x1d8] sm:$0xff] %v267
                %v269 = vld [vmem:[%s147 + $0x3c0] sm:$0xff]
                %270 = vst [vmem:[%s148 + $0x1e0] sm:$0xff] %v269
                %v271 = vld [vmem:[%s147 + $0x3c8] sm:$0xff]
                %272 = vst [vmem:[%s148 + $0x1e8] sm:$0xff] %v271
                %v273 = vld [vmem:[%s147 + $0x3d0] sm:$0xff]
                %274 = vst [vmem:[%s148 + $0x1f0] sm:$0xff] %v273
                %v275 = vld [vmem:[%s147 + $0x3d8] sm:$0xff]
                %276 = vst [vmem:[%s148 + $0x1f8] sm:$0xff] %v275
                %v277 = vld [vmem:[%s147 + $0x400] sm:$0xff]
                %278 = vst [vmem:[%s148 + $0x200] sm:$0xff] %v277
                %v279 = vld [vmem:[%s147 + $0x408] sm:$0xff]
                %280 = vst [vmem:[%s148 + $0x208] sm:$0xff] %v279
                %v281 = vld [vmem:[%s147 + $0x410] sm:$0xff]
                %282 = vst [vmem:[%s148 + $0x210] sm:$0xff] %v281
                %v283 = vld [vmem:[%s147 + $0x418] sm:$0xff]
                %284 = vst [vmem:[%s148 + $0x218] sm:$0xff] %v283
                %v285 = vld [vmem:[%s147 + $0x440] sm:$0xff]
                %286 = vst [vmem:[%s148 + $0x220] sm:$0xff] %v285
                %v287 = vld [vmem:[%s147 + $0x448] sm:$0xff]
                %288 = vst [vmem:[%s148 + $0x228] sm:$0xff] %v287
                %v289 = vld [vmem:[%s147 + $0x450] sm:$0xff]
                %290 = vst [vmem:[%s148 + $0x230] sm:$0xff] %v289
                %v291 = vld [vmem:[%s147 + $0x458] sm:$0xff]
                %292 = vst [vmem:[%s148 + $0x238] sm:$0xff] %v291
                %v293 = vld [vmem:[%s147 + $0x480] sm:$0xff]
                %294 = vst [vmem:[%s148 + $0x240] sm:$0xff] %v293
                %v295 = vld [vmem:[%s147 + $0x488] sm:$0xff]
                %296 = vst [vmem:[%s148 + $0x248] sm:$0xff] %v295
                %v297 = vld [vmem:[%s147 + $0x490] sm:$0xff]
                %298 = vst [vmem:[%s148 + $0x250] sm:$0xff] %v297
                %v299 = vld [vmem:[%s147 + $0x498] sm:$0xff]
                %300 = vst [vmem:[%s148 + $0x258] sm:$0xff] %v299
                %v301 = vld [vmem:[%s147 + $0x4c0] sm:$0xff]
                %302 = vst [vmem:[%s148 + $0x260] sm:$0xff] %v301
                %v303 = vld [vmem:[%s147 + $0x4c8] sm:$0xff]
                %304 = vst [vmem:[%s148 + $0x268] sm:$0xff] %v303
                %v305 = vld [vmem:[%s147 + $0x4d0] sm:$0xff]
                %306 = vst [vmem:[%s148 + $0x270] sm:$0xff] %v305
                %v307 = vld [vmem:[%s147 + $0x4d8] sm:$0xff]
                %308 = vst [vmem:[%s148 + $0x278] sm:$0xff] %v307
                %v309 = vld [vmem:[%s147 + $0x500] sm:$0xff]
                %310 = vst [vmem:[%s148 + $0x280] sm:$0xff] %v309
                %v311 = vld [vmem:[%s147 + $0x508] sm:$0xff]
                %312 = vst [vmem:[%s148 + $0x288] sm:$0xff] %v311
                %v313 = vld [vmem:[%s147 + $0x510] sm:$0xff]
                %314 = vst [vmem:[%s148 + $0x290] sm:$0xff] %v313
                %v315 = vld [vmem:[%s147 + $0x518] sm:$0xff]
                %316 = vst [vmem:[%s148 + $0x298] sm:$0xff] %v315
                %v317 = vld [vmem:[%s147 + $0x540] sm:$0xff]
                %318 = vst [vmem:[%s148 + $0x2a0] sm:$0xff] %v317
                %v319 = vld [vmem:[%s147 + $0x548] sm:$0xff]
                %320 = vst [vmem:[%s148 + $0x2a8] sm:$0xff] %v319
                %v321 = vld [vmem:[%s147 + $0x550] sm:$0xff]
                %322 = vst [vmem:[%s148 + $0x2b0] sm:$0xff] %v321
                %v323 = vld [vmem:[%s147 + $0x558] sm:$0xff]
                %324 = vst [vmem:[%s148 + $0x2b8] sm:$0xff] %v323
                %v325 = vld [vmem:[%s147 + $0x580] sm:$0xff]
                %326 = vst [vmem:[%s148 + $0x2c0] sm:$0xff] %v325
                %v327 = vld [vmem:[%s147 + $0x588] sm:$0xff]
                %328 = vst [vmem:[%s148 + $0x2c8] sm:$0xff] %v327
                %v329 = vld [vmem:[%s147 + $0x590] sm:$0xff]
                %330 = vst [vmem:[%s148 + $0x2d0] sm:$0xff] %v329
                %v331 = vld [vmem:[%s147 + $0x598] sm:$0xff]
                %332 = vst [vmem:[%s148 + $0x2d8] sm:$0xff] %v331
                %v333 = vld [vmem:[%s147 + $0x5c0] sm:$0xff]
                %334 = vst [vmem:[%s148 + $0x2e0] sm:$0xff] %v333
                %v335 = vld [vmem:[%s147 + $0x5c8] sm:$0xff]
                %336 = vst [vmem:[%s148 + $0x2e8] sm:$0xff] %v335
                %v337 = vld [vmem:[%s147 + $0x5d0] sm:$0xff]
                %338 = vst [vmem:[%s148 + $0x2f0] sm:$0xff] %v337
                %v339 = vld [vmem:[%s147 + $0x5d8] sm:$0xff]
                %340 = vst [vmem:[%s148 + $0x2f8] sm:$0xff] %v339
                %v341 = vld [vmem:[%s147 + $0x600] sm:$0xff]
                %342 = vst [vmem:[%s148 + $0x300] sm:$0xff] %v341
                %v343 = vld [vmem:[%s147 + $0x608] sm:$0xff]
                %344 = vst [vmem:[%s148 + $0x308] sm:$0xff] %v343
                %v345 = vld [vmem:[%s147 + $0x610] sm:$0xff]
                %346 = vst [vmem:[%s148 + $0x310] sm:$0xff] %v345
                %v347 = vld [vmem:[%s147 + $0x618] sm:$0xff]
                %348 = vst [vmem:[%s148 + $0x318] sm:$0xff] %v347
                %v349 = vld [vmem:[%s147 + $0x640] sm:$0xff]
                %350 = vst [vmem:[%s148 + $0x320] sm:$0xff] %v349
                %v351 = vld [vmem:[%s147 + $0x648] sm:$0xff]
                %352 = vst [vmem:[%s148 + $0x328] sm:$0xff] %v351
                %v353 = vld [vmem:[%s147 + $0x650] sm:$0xff]
                %354 = vst [vmem:[%s148 + $0x330] sm:$0xff] %v353
                %v355 = vld [vmem:[%s147 + $0x658] sm:$0xff]
                %356 = vst [vmem:[%s148 + $0x338] sm:$0xff] %v355
                %v357 = vld [vmem:[%s147 + $0x680] sm:$0xff]
                %358 = vst [vmem:[%s148 + $0x340] sm:$0xff] %v357
                %v359 = vld [vmem:[%s147 + $0x688] sm:$0xff]
                %360 = vst [vmem:[%s148 + $0x348] sm:$0xff] %v359
                %v361 = vld [vmem:[%s147 + $0x690] sm:$0xff]
                %362 = vst [vmem:[%s148 + $0x350] sm:$0xff] %v361
                %v363 = vld [vmem:[%s147 + $0x698] sm:$0xff]
                %364 = vst [vmem:[%s148 + $0x358] sm:$0xff] %v363
                %v365 = vld [vmem:[%s147 + $0x6c0] sm:$0xff]
                %366 = vst [vmem:[%s148 + $0x360] sm:$0xff] %v365
                %v367 = vld [vmem:[%s147 + $0x6c8] sm:$0xff]
                %368 = vst [vmem:[%s148 + $0x368] sm:$0xff] %v367
                %v369 = vld [vmem:[%s147 + $0x6d0] sm:$0xff]
                %370 = vst [vmem:[%s148 + $0x370] sm:$0xff] %v369
                %v371 = vld [vmem:[%s147 + $0x6d8] sm:$0xff]
                %372 = vst [vmem:[%s148 + $0x378] sm:$0xff] %v371
                %v373 = vld [vmem:[%s147 + $0x700] sm:$0xff]
                %374 = vst [vmem:[%s148 + $0x380] sm:$0xff] %v373
                %v375 = vld [vmem:[%s147 + $0x708] sm:$0xff]
                %376 = vst [vmem:[%s148 + $0x388] sm:$0xff] %v375
                %v377 = vld [vmem:[%s147 + $0x710] sm:$0xff]
                %378 = vst [vmem:[%s148 + $0x390] sm:$0xff] %v377
                %v379 = vld [vmem:[%s147 + $0x718] sm:$0xff]
                %380 = vst [vmem:[%s148 + $0x398] sm:$0xff] %v379
                %v381 = vld [vmem:[%s147 + $0x740] sm:$0xff]
                %382 = vst [vmem:[%s148 + $0x3a0] sm:$0xff] %v381
                %v383 = vld [vmem:[%s147 + $0x748] sm:$0xff]
                %384 = vst [vmem:[%s148 + $0x3a8] sm:$0xff] %v383
                %v385 = vld [vmem:[%s147 + $0x750] sm:$0xff]
                %386 = vst [vmem:[%s148 + $0x3b0] sm:$0xff] %v385
                %v387 = vld [vmem:[%s147 + $0x758] sm:$0xff]
                %388 = vst [vmem:[%s148 + $0x3b8] sm:$0xff] %v387
                %v389 = vld [vmem:[%s147 + $0x780] sm:$0xff]
                %390 = vst [vmem:[%s148 + $0x3c0] sm:$0xff] %v389
                %v391 = vld [vmem:[%s147 + $0x788] sm:$0xff]
                %392 = vst [vmem:[%s148 + $0x3c8] sm:$0xff] %v391
                %v393 = vld [vmem:[%s147 + $0x790] sm:$0xff]
                %394 = vst [vmem:[%s148 + $0x3d0] sm:$0xff] %v393
                %v395 = vld [vmem:[%s147 + $0x798] sm:$0xff]
                %396 = vst [vmem:[%s148 + $0x3d8] sm:$0xff] %v395
                %v397 = vld [vmem:[%s147 + $0x7c0] sm:$0xff]
                %398 = vst [vmem:[%s148 + $0x3e0] sm:$0xff] %v397
                %v399 = vld [vmem:[%s147 + $0x7c8] sm:$0xff]
                %400 = vst [vmem:[%s148 + $0x3e8] sm:$0xff] %v399
                %v401 = vld [vmem:[%s147 + $0x7d0] sm:$0xff]
                %402 = vst [vmem:[%s148 + $0x3f0] sm:$0xff] %v401
                %v403 = vld [vmem:[%s147 + $0x7d8] sm:$0xff]
                %404 = vst [vmem:[%s148 + $0x3f8] sm:$0xff] %v403
              $region37: #{upsample_bilinear2d.1} parent=31 // loop_footer
                %s146 = sadd.s32 1, %s142
              $region38: #{upsample_bilinear2d.1} parent=31 // loop_footer_branch
                %141 = sbr.rel target = $region34
              $region39: #{upsample_bilinear2d.1} parent=31 // loop_exit
                _
            $region32: #{upsample_bilinear2d.1} parent=27 // pred_fallthru
              _
            // Predicated region
            $region40: #{upsample_bilinear2d.1} parent=27 // pred_check
              _
            $region41: #{upsample_bilinear2d.1} parent=27 // pred_check_branch
              %406 = sbr.rel target = $region43
            $region42: #{upsample_bilinear2d.1} parent=27 // pred_region
              _
            $region43: #{upsample_bilinear2d.1} parent=27 // pred_fallthru
              _
          $region28: #{upsample_bilinear2d.1} parent=23 // pred_fallthru
            _
          %407 = vnop
        $region24: #{upsample_bilinear2d.1} parent=19 // pred_fallthru
          _
      $region20: #{upsample_bilinear2d.1} parent=5 // pred_fallthru
        _
      %p408 = scmp.le.s32.totalorder 1, %s8
      %p409 = scmp.lt.s32.totalorder %s8, 3
      %p410 = pnand %p408, %p409
      %p411 = pneg %p410
      // Predicated region
      $region44: #{upsample_bilinear2d.1} parent=5 // pred_check
        _
      $region45: #{upsample_bilinear2d.1} parent=5 // pred_check_branch
        %413 = sbr.rel (%p410) target = $region47
      $region46: #{upsample_bilinear2d.1} parent=5 // pred_region
        %s414 = ssub.s32 %s8, 1
        %s415 = sand.u32 %s59, 1
        %s416 = sand.u32 %s59, 1
        %s417 = smul.addr %s416, 1024
        %s418 = scalar_lea.vmem [#allocation2], %s417
        // Predicated region
        $region48: #{upsample_bilinear2d.1} parent=46 // pred_check
          %p419 = pneg %p72
        $region49: #{upsample_bilinear2d.1} parent=46 // pred_check_branch
          %421 = sbr.rel (%p419) target = $region51
        $region50: #{upsample_bilinear2d.1} parent=46 // pred_region
          _
        $region51: #{upsample_bilinear2d.1} parent=46 // pred_fallthru
          _
        %p422 = scmp.lt.s32.totalorder %s17, 0
        %s423 = scalar_select %p422, %s17, 0
        %s424 = smul.addr %s423, 2
        %s425 = smul.addr %s424, 8
        %s426 = scalar_lea.vmem %s0, %s425
        %p427 = pneg %p46
        %p428 = pneg %p43
        %s429 = sand.u32 %s59, 1
        %s430 = sand.u32 %s59, 1
        %s431 = smul.addr %s430, 1024
        %s432 = scalar_lea.vmem [#allocation2], %s431
        %p433 = pneg %p72
        %p434 = pneg %p69
        %p435 = pneg %p100
        %p436 = pneg %p97
        %s437 = smul.u32 4, %s18
        %p438 = scmp.lt.s32.totalorder %s17, 0
        %s439 = scalar_select %p438, %s17, 0
        %p440 = scmp.lt.s32.totalorder %s437, 7
        %s441 = scalar_select %p440, %s437, 7
        %s442 = smul.addr %s439, 8
        %s443 = sadd.s32 %s441, %s442
        %s444 = smul.addr %s443, 8
        %s445 = scalar_lea.vmem %s2, %s444
        %p446 = scmp.lt.s32.totalorder %s17, 0
        %s447 = scalar_select %p446, %s17, 0
        %s448 = smul.addr %s447, 2
        %s449 = smul.addr %s448, 8
        %s450 = scalar_lea.vmem %s0, %s449
        %s451 = smul.u32 4, %s18
        %s452 = smul.u32 4, %s18
        %p453 = scmp.lt.s32.totalorder %s17, 0
        %s454 = scalar_select %p453, %s17, 0
        %p455 = scmp.lt.s32.totalorder %s452, 7
        %s456 = scalar_select %p455, %s452, 7
        %s457 = smul.addr %s454, 8
        %s458 = sadd.s32 %s456, %s457
        %s459 = smul.addr %s458, 8
        %s460 = scalar_lea.vmem %s2, %s459
        %s461 = smul.u32 4, %s18
        %v462 = vld [vmem:[%s450] sm:$0xff]
        %v463 = vld [vmem:[%s450 + $0x8] sm:$0xff]
        %v464 = vld [vmem:[%s418] sm:$0xff]
        %v465 = vld [vmem:[%s418 + $0x8] sm:$0xff]
        %v466 = vld [vmem:[%s418 + $0x10] sm:$0xff]
        %v467 = vld [vmem:[%s418 + $0x18] sm:$0xff]
        %v468 = vld [vmem:[%s418 + $0x20] sm:$0xff]
        %v469 = vld [vmem:[%s418 + $0x28] sm:$0xff]
        %v470 = vld [vmem:[%s418 + $0x30] sm:$0xff]
        %v471 = vld [vmem:[%s418 + $0x38] sm:$0xff]
        %v472 = vld [vmem:[%s418 + $0x40] sm:$0xff]
        %v473 = vld [vmem:[%s418 + $0x48] sm:$0xff]
        %v474 = vld [vmem:[%s418 + $0x50] sm:$0xff]
        %v475 = vld [vmem:[%s418 + $0x58] sm:$0xff]
        %v476 = vld [vmem:[%s418 + $0x60] sm:$0xff]
        %v477 = vld [vmem:[%s418 + $0x68] sm:$0xff]
        %v478 = vld [vmem:[%s418 + $0x70] sm:$0xff]
        %v479 = vld [vmem:[%s418 + $0x78] sm:$0xff]
        %v480 = vld [vmem:[%s418 + $0x80] sm:$0xff]
        %v481 = vld [vmem:[%s418 + $0x88] sm:$0xff]
        %v482 = vld [vmem:[%s418 + $0x90] sm:$0xff]
        %v483 = vld [vmem:[%s418 + $0x98] sm:$0xff]
        %v484 = vld [vmem:[%s418 + $0xa0] sm:$0xff]
        %v485 = vld [vmem:[%s418 + $0xa8] sm:$0xff]
        %v486 = vld [vmem:[%s418 + $0xb0] sm:$0xff]
        %v487 = vld [vmem:[%s418 + $0xb8] sm:$0xff]
        %v488 = vld [vmem:[%s418 + $0xc0] sm:$0xff]
        %v489 = vld [vmem:[%s418 + $0xc8] sm:$0xff]
        %v490 = vld [vmem:[%s418 + $0xd0] sm:$0xff]
        %v491 = vld [vmem:[%s418 + $0xd8] sm:$0xff]
        %v492 = vld [vmem:[%s418 + $0xe0] sm:$0xff]
        %v493 = vld [vmem:[%s418 + $0xe8] sm:$0xff]
        %v494 = vld [vmem:[%s418 + $0xf0] sm:$0xff]
        %v495 = vld [vmem:[%s418 + $0xf8] sm:$0xff]
        %v496 = vld [vmem:[%s418 + $0x100] sm:$0xff]
        %v497 = vld [vmem:[%s418 + $0x108] sm:$0xff]
        %v498 = vld [vmem:[%s418 + $0x110] sm:$0xff]
        %v499 = vld [vmem:[%s418 + $0x118] sm:$0xff]
        %v500 = vld [vmem:[%s418 + $0x120] sm:$0xff]
        %v501 = vld [vmem:[%s418 + $0x128] sm:$0xff]
        %v502 = vld [vmem:[%s418 + $0x130] sm:$0xff]
        %v503 = vld [vmem:[%s418 + $0x138] sm:$0xff]
        %v504 = vld [vmem:[%s418 + $0x140] sm:$0xff]
        %v505 = vld [vmem:[%s418 + $0x148] sm:$0xff]
        %v506 = vld [vmem:[%s418 + $0x150] sm:$0xff]
        %v507 = vld [vmem:[%s418 + $0x158] sm:$0xff]
        %v508 = vld [vmem:[%s418 + $0x160] sm:$0xff]
        %v509 = vld [vmem:[%s418 + $0x168] sm:$0xff]
        %v510 = vld [vmem:[%s418 + $0x170] sm:$0xff]
        %v511 = vld [vmem:[%s418 + $0x178] sm:$0xff]
        %v512 = vld [vmem:[%s418 + $0x180] sm:$0xff]
        %v513 = vld [vmem:[%s418 + $0x188] sm:$0xff]
        %v514 = vld [vmem:[%s418 + $0x190] sm:$0xff]
        %v515 = vld [vmem:[%s418 + $0x198] sm:$0xff]
        %v516 = vld [vmem:[%s418 + $0x1a0] sm:$0xff]
        %v517 = vld [vmem:[%s418 + $0x1a8] sm:$0xff]
        %v518 = vld [vmem:[%s418 + $0x1b0] sm:$0xff]
        %v519 = vld [vmem:[%s418 + $0x1b8] sm:$0xff]
        %v520 = vld [vmem:[%s418 + $0x1c0] sm:$0xff]
        %v521 = vld [vmem:[%s418 + $0x1c8] sm:$0xff]
        %v522 = vld [vmem:[%s418 + $0x1d0] sm:$0xff]
        %v523 = vld [vmem:[%s418 + $0x1d8] sm:$0xff]
        %v524 = vld [vmem:[%s418 + $0x1e0] sm:$0xff]
        %v525 = vld [vmem:[%s418 + $0x1e8] sm:$0xff]
        %v526 = vld [vmem:[%s418 + $0x1f0] sm:$0xff]
        %v527 = vld [vmem:[%s418 + $0x1f8] sm:$0xff]
        %v528 = vld [vmem:[%s418 + $0x200] sm:$0xff]
        %v529 = vld [vmem:[%s418 + $0x208] sm:$0xff]
        %v530 = vld [vmem:[%s418 + $0x210] sm:$0xff]
        %v531 = vld [vmem:[%s418 + $0x218] sm:$0xff]
        %v532 = vld [vmem:[%s418 + $0x220] sm:$0xff]
        %v533 = vld [vmem:[%s418 + $0x228] sm:$0xff]
        %v534 = vld [vmem:[%s418 + $0x230] sm:$0xff]
        %v535 = vld [vmem:[%s418 + $0x238] sm:$0xff]
        %v536 = vld [vmem:[%s418 + $0x240] sm:$0xff]
        %v537 = vld [vmem:[%s418 + $0x248] sm:$0xff]
        %v538 = vld [vmem:[%s418 + $0x250] sm:$0xff]
        %v539 = vld [vmem:[%s418 + $0x258] sm:$0xff]
        %v540 = vld [vmem:[%s418 + $0x260] sm:$0xff]
        %v541 = vld [vmem:[%s418 + $0x268] sm:$0xff]
        %v542 = vld [vmem:[%s418 + $0x270] sm:$0xff]
        %v543 = vld [vmem:[%s418 + $0x278] sm:$0xff]
        %v544 = vld [vmem:[%s418 + $0x280] sm:$0xff]
        %v545 = vld [vmem:[%s418 + $0x288] sm:$0xff]
        %v546 = vld [vmem:[%s418 + $0x290] sm:$0xff]
        %v547 = vld [vmem:[%s418 + $0x298] sm:$0xff]
        %v548 = vld [vmem:[%s418 + $0x2a0] sm:$0xff]
        %v549 = vld [vmem:[%s418 + $0x2a8] sm:$0xff]
        %v550 = vld [vmem:[%s418 + $0x2b0] sm:$0xff]
        %v551 = vld [vmem:[%s418 + $0x2b8] sm:$0xff]
        %v552 = vld [vmem:[%s418 + $0x2c0] sm:$0xff]
        %v553 = vld [vmem:[%s418 + $0x2c8] sm:$0xff]
        %v554 = vld [vmem:[%s418 + $0x2d0] sm:$0xff]
        %v555 = vld [vmem:[%s418 + $0x2d8] sm:$0xff]
        %v556 = vld [vmem:[%s418 + $0x2e0] sm:$0xff]
        %v557 = vld [vmem:[%s418 + $0x2e8] sm:$0xff]
        %v558 = vld [vmem:[%s418 + $0x2f0] sm:$0xff]
        %v559 = vld [vmem:[%s418 + $0x2f8] sm:$0xff]
        %v560 = vld [vmem:[%s418 + $0x300] sm:$0xff]
        %v561 = vld [vmem:[%s418 + $0x308] sm:$0xff]
        %v562 = vld [vmem:[%s418 + $0x310] sm:$0xff]
        %v563 = vld [vmem:[%s418 + $0x318] sm:$0xff]
        %v564 = vld [vmem:[%s418 + $0x320] sm:$0xff]
        %v565 = vld [vmem:[%s418 + $0x328] sm:$0xff]
        %v566 = vld [vmem:[%s418 + $0x330] sm:$0xff]
        %v567 = vld [vmem:[%s418 + $0x338] sm:$0xff]
        %v568 = vld [vmem:[%s418 + $0x340] sm:$0xff]
        %v569 = vld [vmem:[%s418 + $0x348] sm:$0xff]
        %v570 = vld [vmem:[%s418 + $0x350] sm:$0xff]
        %v571 = vld [vmem:[%s418 + $0x358] sm:$0xff]
        %v572 = vld [vmem:[%s418 + $0x360] sm:$0xff]
        %v573 = vld [vmem:[%s418 + $0x368] sm:$0xff]
        %v574 = vld [vmem:[%s418 + $0x370] sm:$0xff]
        %v575 = vld [vmem:[%s418 + $0x378] sm:$0xff]
        %v576 = vld [vmem:[%s418 + $0x380] sm:$0xff]
        %v577 = vld [vmem:[%s418 + $0x388] sm:$0xff]
        %v578 = vld [vmem:[%s418 + $0x390] sm:$0xff]
        %v579 = vld [vmem:[%s418 + $0x398] sm:$0xff]
        %v580 = vld [vmem:[%s418 + $0x3a0] sm:$0xff]
        %v581 = vld [vmem:[%s418 + $0x3a8] sm:$0xff]
        %v582 = vld [vmem:[%s418 + $0x3b0] sm:$0xff]
        %v583 = vld [vmem:[%s418 + $0x3b8] sm:$0xff]
        %v584 = vld [vmem:[%s418 + $0x3c0] sm:$0xff]
        %v585 = vld [vmem:[%s418 + $0x3c8] sm:$0xff]
        %v586 = vld [vmem:[%s418 + $0x3d0] sm:$0xff]
        %v587 = vld [vmem:[%s418 + $0x3d8] sm:$0xff]
        %v588 = vld [vmem:[%s418 + $0x3e0] sm:$0xff]
        %v589 = vld [vmem:[%s418 + $0x3e8] sm:$0xff]
        %v590 = vld [vmem:[%s418 + $0x3f0] sm:$0xff]
        %v591 = vld [vmem:[%s418 + $0x3f8] sm:$0xff]
        %592 = vmatprep.subr.mxu0 %v465
        %593 = vmatpush1.msra.mxu0 %v464
        %594 = vmatprep.subr.mxu0 %v469
        %595 = vmatpush1.msra.mxu0 %v468
        %596 = vmatprep.subr.mxu0 %v473
        %597 = vmatpush1.msra.mxu0 %v472
        %598 = vmatprep.subr.mxu0 %v477
        %599 = vmatpush1.msra.mxu0 %v476
        %600 = vmatprep.subr.mxu0 %v481
        %601 = vmatpush1.msra.mxu0 %v480
        %602 = vmatprep.subr.mxu0 %v485
        %603 = vmatpush1.msra.mxu0 %v484
        %604 = vmatprep.subr.mxu0 %v489
        %605 = vmatpush1.msra.mxu0 %v488
        %606 = vmatprep.subr.mxu0 %v493
        %607 = vmatpush1.msra.mxu0 %v492
        %608 = vmatprep.subr.mxu0 %v497
        %609 = vmatpush1.msra.mxu0 %v496
        %610 = vmatprep.subr.mxu0 %v501
        %611 = vmatpush1.msra.mxu0 %v500
        %612 = vmatprep.subr.mxu0 %v505
        %613 = vmatpush1.msra.mxu0 %v504
        %614 = vmatprep.subr.mxu0 %v509
        %615 = vmatpush1.msra.mxu0 %v508
        %616 = vmatprep.subr.mxu0 %v513
        %617 = vmatpush1.msra.mxu0 %v512
        %618 = vmatprep.subr.mxu0 %v517
        %619 = vmatpush1.msra.mxu0 %v516
        %620 = vmatprep.subr.mxu0 %v521
        %621 = vmatpush1.msra.mxu0 %v520
        %622 = vmatprep.subr.mxu0 %v525
        %623 = vmatpush1.msra.mxu0 %v524
        %624 = vmatprep.subr.mxu0 %v529
        %625 = vmatpush1.msra.mxu0 %v528
        %626 = vmatprep.subr.mxu0 %v533
        %627 = vmatpush1.msra.mxu0 %v532
        %628 = vmatprep.subr.mxu0 %v537
        %629 = vmatpush1.msra.mxu0 %v536
        %630 = vmatprep.subr.mxu0 %v541
        %631 = vmatpush1.msra.mxu0 %v540
        %632 = vmatprep.subr.mxu0 %v545
        %633 = vmatpush1.msra.mxu0 %v544
        %634 = vmatprep.subr.mxu0 %v549
        %635 = vmatpush1.msra.mxu0 %v548
        %636 = vmatprep.subr.mxu0 %v553
        %637 = vmatpush1.msra.mxu0 %v552
        %638 = vmatprep.subr.mxu0 %v557
        %639 = vmatpush1.msra.mxu0 %v556
        %640 = vmatprep.subr.mxu0 %v561
        %641 = vmatpush1.msra.mxu0 %v560
        %642 = vmatprep.subr.mxu0 %v565
        %643 = vmatpush1.msra.mxu0 %v564
        %644 = vmatprep.subr.mxu0 %v569
        %645 = vmatpush1.msra.mxu0 %v568
        %646 = vmatprep.subr.mxu0 %v573
        %647 = vmatpush1.msra.mxu0 %v572
        %648 = vmatprep.subr.mxu0 %v577
        %649 = vmatpush1.msra.mxu0 %v576
        %650 = vmatprep.subr.mxu0 %v581
        %651 = vmatpush1.msra.mxu0 %v580
        %652 = vmatprep.subr.mxu0 %v585
        %653 = vmatpush1.msra.mxu0 %v584
        %654 = vmatprep.subr.mxu0 %v589
        %655 = vmatpush1.msra.mxu0 %v588
        %656 = vmatprep.mubr.f32.mxu0 %v463
        %657 = vmatmul.mubr.f32.gmra.mrb[0].mxu0 %v462
        %v658 = vpop.f32.mrb[0].mxu0
        %v659 = vadd.f32 0.0, %v658
        %v660 = vpop.f32.mrb[0].mxu0
        %v661 = vadd.f32 0.0, %v660
        %662 = vdwg.mxu0
        %663 = vmatprep.subr.mxu0 %v467
        %664 = vmatpush1.msra.mxu0 %v466
        %665 = vmatprep.subr.mxu0 %v471
        %666 = vmatpush1.msra.mxu0 %v470
        %667 = vmatprep.subr.mxu0 %v475
        %668 = vmatpush1.msra.mxu0 %v474
        %669 = vmatprep.subr.mxu0 %v479
        %670 = vmatpush1.msra.mxu0 %v478
        %671 = vmatprep.subr.mxu0 %v483
        %672 = vmatpush1.msra.mxu0 %v482
        %673 = vmatprep.subr.mxu0 %v487
        %674 = vmatpush1.msra.mxu0 %v486
        %675 = vmatprep.subr.mxu0 %v491
        %676 = vmatpush1.msra.mxu0 %v490
        %677 = vmatprep.subr.mxu0 %v495
        %678 = vmatpush1.msra.mxu0 %v494
        %679 = vmatprep.subr.mxu0 %v499
        %680 = vmatpush1.msra.mxu0 %v498
        %681 = vmatprep.subr.mxu0 %v503
        %682 = vmatpush1.msra.mxu0 %v502
        %683 = vmatprep.subr.mxu0 %v507
        %684 = vmatpush1.msra.mxu0 %v506
        %685 = vmatprep.subr.mxu0 %v511
        %686 = vmatpush1.msra.mxu0 %v510
        %687 = vmatprep.subr.mxu0 %v515
        %688 = vmatpush1.msra.mxu0 %v514
        %689 = vmatprep.subr.mxu0 %v519
        %690 = vmatpush1.msra.mxu0 %v518
        %691 = vmatprep.subr.mxu0 %v523
        %692 = vmatpush1.msra.mxu0 %v522
        %693 = vmatprep.subr.mxu0 %v527
        %694 = vmatpush1.msra.mxu0 %v526
        %695 = vmatprep.subr.mxu0 %v531
        %696 = vmatpush1.msra.mxu0 %v530
        %697 = vmatprep.subr.mxu0 %v535
        %698 = vmatpush1.msra.mxu0 %v534
        %699 = vmatprep.subr.mxu0 %v539
        %700 = vmatpush1.msra.mxu0 %v538
        %701 = vmatprep.subr.mxu0 %v543
        %702 = vmatpush1.msra.mxu0 %v542
        %703 = vmatprep.subr.mxu0 %v547
        %704 = vmatpush1.msra.mxu0 %v546
        %705 = vmatprep.subr.mxu0 %v551
        %706 = vmatpush1.msra.mxu0 %v550
        %707 = vmatprep.subr.mxu0 %v555
        %708 = vmatpush1.msra.mxu0 %v554
        %709 = vmatprep.subr.mxu0 %v559
        %710 = vmatpush1.msra.mxu0 %v558
        %711 = vmatprep.subr.mxu0 %v563
        %712 = vmatpush1.msra.mxu0 %v562
        %713 = vmatprep.subr.mxu0 %v567
        %714 = vmatpush1.msra.mxu0 %v566
        %715 = vmatprep.subr.mxu0 %v571
        %716 = vmatpush1.msra.mxu0 %v570
        %717 = vmatprep.subr.mxu0 %v575
        %718 = vmatpush1.msra.mxu0 %v574
        %719 = vmatprep.subr.mxu0 %v579
        %720 = vmatpush1.msra.mxu0 %v578
        %721 = vmatprep.subr.mxu0 %v583
        %722 = vmatpush1.msra.mxu0 %v582
        %723 = vmatprep.subr.mxu0 %v587
        %724 = vmatpush1.msra.mxu0 %v586
        %725 = vmatprep.subr.mxu0 %v591
        %726 = vmatpush1.msra.mxu0 %v590
        %727 = vmatprep.mubr.f32.mxu0 %v463
        %728 = vmatmul.mubr.f32.gmra.mrb[0].mxu0 %v462
        %v729 = vpop.f32.mrb[0].mxu0
        %v730 = vadd.f32 0.0, %v729
        %v731 = vpop.f32.mrb[0].mxu0
        %v732 = vadd.f32 0.0, %v731
        %733 = vdwg.mxu0
        %734 = vst [vmem:[%s460] sm:$0xff] %v659
        %735 = vst [vmem:[%s460 + $0x8] sm:$0xff] %v661
        %736 = vst [vmem:[%s460 + $0x10] sm:$0xff] %v730
        %737 = vst [vmem:[%s460 + $0x18] sm:$0xff] %v732
        %s738 = smul.u32 4, %s18
        %p739 = scmp.lt.s32.totalorder %s17, 0
        %s740 = scalar_select %p739, %s17, 0
        %p741 = scmp.lt.s32.totalorder %s738, 7
        %s742 = scalar_select %p741, %s738, 7
        %s743 = smul.addr %s740, 8
        %s744 = sadd.s32 %s742, %s743
        %s745 = smul.addr %s744, 8
        %s746 = scalar_lea.vmem %s2, %s745
        // Predicated region
        $region52: #{upsample_bilinear2d.1} parent=46 // pred_check
          %p747 = pneg %p97
        $region53: #{upsample_bilinear2d.1} parent=46 // pred_check_branch
          %749 = sbr.rel (%p747) target = $region55
        $region54: #{upsample_bilinear2d.1} parent=46 // pred_region
          %s750 = smul.u32 4, %s18
        $region55: #{upsample_bilinear2d.1} parent=46 // pred_fallthru
          _
      $region47: #{upsample_bilinear2d.1} parent=5 // pred_fallthru
        _
      %p751 = scmp.le.s32.totalorder 2, %s8
      // Predicated region
      $region56: #{upsample_bilinear2d.1} parent=5 // pred_check
        %p752 = pneg %p751
      $region57: #{upsample_bilinear2d.1} parent=5 // pred_check_branch
        %754 = sbr.rel (%p752) target = $region59
      $region58: #{upsample_bilinear2d.1} parent=5 // pred_region
        %s755 = ssub.s32 %s8, 2
        // Predicated region
        $region60: #{upsample_bilinear2d.1} parent=58 // pred_check
          %p756 = pneg %p103
        $region61: #{upsample_bilinear2d.1} parent=58 // pred_check_branch
          %758 = sbr.rel (%p756) target = $region63
        $region62: #{upsample_bilinear2d.1} parent=58 // pred_region
          %s759 = smul.u32 4, %s20
          %p760 = scmp.lt.s32.totalorder %s19, 0
          %s761 = scalar_select %p760, %s19, 0
          %p762 = scmp.lt.s32.totalorder %s759, 7
          %s763 = scalar_select %p762, %s759, 7
          %s764 = smul.addr %s761, 8
          %s765 = sadd.s32 %s763, %s764
          %s766 = smul.addr %s765, 8
          %s767 = scalar_lea.vmem %s2, %s766
        $region63: #{upsample_bilinear2d.1} parent=58 // pred_fallthru
          _
      $region59: #{upsample_bilinear2d.1} parent=5 // pred_fallthru
        _
    $region6: #{upsample_bilinear2d.1} parent=1 // loop_footer
      %s12 = sadd.s32 1, %s8
    $region7: #{upsample_bilinear2d.1} parent=1 // loop_footer_branch
      %7 = sbr.rel target = $region3
    $region8: #{upsample_bilinear2d.1} parent=1 // loop_exit
      _

</llo_original>
